<compile_context>
chip_gen: v7x
topology: tpu7x:2x2x1
jax: 0.10.0
libtpu: 0.0.40
codegen_flags: <defaults>
</compile_context>

<pallas_src>
import functools

import jax
import jax.numpy as jnp
from jax import lax
from jax.experimental import pallas as pl
from jax.experimental.pallas import tpu as pltpu

CONFIG = dict(vocab_size=32, emb_size=8, context_window=8, d_model=32)

LANE = 128
SUBLANE = 8
MAX_BATCH_TILE = 512   # rows per grid step once the batch gets large


def _round_up(x, m):
    return (x + m - 1) // m * m


# --------------------------------------------------------------------------
# Kernel bodies
# --------------------------------------------------------------------------
def _compute_logits(idx_ref, folded_ref, b1_ref, w2_ref, b2_ref, *, ctx, vocab):
    """Fused [Embedding + Linear1] (one-hot @ folded table) -> Tanh -> Linear2."""
    idx = idx_ref[...]                                    # (TB, ctx) int32
    tb = idx.shape[0]
    ctxv = ctx * vocab

    # Shift each token id into its position-specific vocab block: t*vocab + id.
    offs = lax.broadcasted_iota(jnp.int32, (1, ctx), 1) * vocab
    shifted = idx + offs                                  # (TB, ctx)

    # Combined one-hot over all ctx positions: (TB, ctx*vocab).  Positions hit
    # disjoint vocab blocks, so a plain sum of compares is exact.
    col = lax.broadcasted_iota(jnp.int32, (tb, ctxv), 1)
    onehot = jnp.zeros((tb, ctxv), jnp.float32)
    for t in range(ctx):                                  # static unroll, VPU only
        onehot = onehot + (col == shifted[:, t:t + 1]).astype(jnp.float32)

    # Single K=ctx*vocab MXU matmul against the pre-folded (emb @ W1) table.
    h_pre = jnp.dot(onehot.astype(jnp.bfloat16), folded_ref[...],
                    preferred_element_type=jnp.float32) + b1_ref[...]
    h = jnp.tanh(h_pre)                                   # (TB, DP) f32 (EUP)

    logits = jnp.dot(h.astype(jnp.bfloat16), w2_ref[...],
                     preferred_element_type=jnp.float32) + b2_ref[...]
    return logits                                         # (TB, VP) f32; padded cols == 0


def _infer_kernel(idx_ref, folded_ref, b1_ref, w2_ref, b2_ref, o_ref, *, ctx, vocab):
    o_ref[...] = _compute_logits(
        idx_ref, folded_ref, b1_ref, w2_ref, b2_ref, ctx=ctx, vocab=vocab
    ).astype(o_ref.dtype)


def _train_kernel(idx_ref, tgt_ref, folded_ref, b1_ref, w2_ref, b2_ref,
                  o_ref, nll_ref, *, ctx, vocab):
    logits = _compute_logits(
        idx_ref, folded_ref, b1_ref, w2_ref, b2_ref, ctx=ctx, vocab=vocab)
    o_ref[...] = logits.astype(o_ref.dtype)

    # Fused cross-entropy epilogue: masked log-softmax over the valid lanes
    # plus per-row NLL (exp/log land on the EUP slot, essentially free).
    tb, vp = logits.shape
    col = lax.broadcasted_iota(jnp.int32, (tb, vp), 1)
    masked = jnp.where(col < vocab, logits, jnp.float32(-1e30))
    m = jnp.max(masked, axis=-1, keepdims=True)
    lse = m + jnp.log(jnp.sum(jnp.exp(masked - m), axis=-1, keepdims=True))
    picked = jnp.sum(jnp.where(col == tgt_ref[...], logits, 0.0),
                     axis=-1, keepdims=True)
    nll_ref[...] = lse - picked                           # (TB, 1) f32


# --------------------------------------------------------------------------
# Wrapper
# --------------------------------------------------------------------------
def _choose_tile(batch):
    """Pick the batch tile: minimal padding, capped rows, >=2 tiles for v7x."""
    n_tiles = pl.cdiv(batch, MAX_BATCH_TILE)
    if batch >= 2 * SUBLANE:
        n_tiles = max(n_tiles, 2)        # give both v7x TensorCores work
    return _round_up(pl.cdiv(batch, n_tiles), SUBLANE)


def fused_forward(idx, packed, targets=None, cfg=CONFIG):
    vocab = cfg["vocab_size"]
    ctx = cfg["context_window"]
    B = idx.shape[0]

    folded, b1p, w2p, b2p = packed["folded"], packed["b1"], packed["w2"], packed["b2"]
    CTXV, DP = folded.shape
    VP = w2p.shape[1]

    tb = _choose_tile(B)
    b_pad = _round_up(B, tb)
    if b_pad != B:
        # TODO(synk): for steady-state training loops keep idx/targets in a
        # pre-padded buffer so this pad never runs on the hot path.
        idx = jnp.pad(idx, ((0, b_pad - B), (0, 0)))
    n_tiles = b_pad // tb

    weight_specs = [
        pl.BlockSpec((CTXV, DP), lambda i: (0, 0)),   # folded emb@W1 (VMEM-resident)
        pl.BlockSpec((1, DP), lambda i: (0, 0)),      # b1
        pl.BlockSpec((DP, VP), lambda i: (0, 0)),     # W2
        pl.BlockSpec((1, VP), lambda i: (0, 0)),      # b2
    ]
    cparams = pltpu.CompilerParams(dimension_semantics=("parallel",))

    if targets is None:
        kernel = functools.partial(_infer_kernel, ctx=ctx, vocab=vocab)
        logits_p = pl.pallas_call(
            kernel,
            out_shape=jax.ShapeDtypeStruct((b_pad, VP), jnp.float32),
            grid=(n_tiles,),
            in_specs=[pl.BlockSpec((tb, ctx), lambda i: (i, 0))] + weight_specs,
            out_specs=pl.BlockSpec((tb, VP), lambda i: (i, 0)),
            compiler_params=cparams,
        )(idx, folded, b1p, w2p, b2p)
        return logits_p[:B, :vocab], None

    tgt = targets.astype(jnp.int32).reshape(-1, 1)
    if b_pad != B:
        tgt = jnp.pad(tgt, ((0, b_pad - B), (0, 0)))

    kernel = functools.partial(_train_kernel, ctx=ctx, vocab=vocab)
    logits_p, nll = pl.pallas_call(
        kernel,
        out_shape=(jax.ShapeDtypeStruct((b_pad, VP), jnp.float32),
                   jax.ShapeDtypeStruct((b_pad, 1), jnp.float32)),
        grid=(n_tiles,),
        in_specs=[pl.BlockSpec((tb, ctx), lambda i: (i, 0)),
                  pl.BlockSpec((tb, 1), lambda i: (i, 0))] + weight_specs,
        out_specs=(pl.BlockSpec((tb, VP), lambda i: (i, 0)),
                   pl.BlockSpec((tb, 1), lambda i: (i, 0))),
        compiler_params=cparams,
    )(idx, tgt, folded, b1p, w2p, b2p)

    loss = jnp.mean(nll[:B, 0])          # padded rows excluded -> correct mean
    return logits_p[:B, :vocab], loss


def simple_model_forward(packed, idx, targets=None, cfg=CONFIG):
    logits, loss = fused_forward(idx, packed, targets=targets, cfg=cfg)
    if targets is not None:
        return logits, loss
    return logits


# --------------------------------------------------------------------------
# Parameters
# --------------------------------------------------------------------------
def init_params(key, cfg):
    """PyTorch-default-equivalent init, linear weights stored as (in, out)."""
    k_emb, k_w1, k_b1, k_w2, k_b2 = jax.random.split(key, 5)
    fan_in1 = cfg["emb_size"] * cfg["context_window"]
    fan_in2 = cfg["d_model"]
    lim1 = 1.0 / jnp.sqrt(fan_in1)
    lim2 = 1.0 / jnp.sqrt(fan_in2)
    return {
        "embedding": jax.random.normal(
            k_emb, (cfg["vocab_size"], cfg["emb_size"]), jnp.float32),
        "w1": jax.random.uniform(
            k_w1, (fan_in1, cfg["d_model"]), jnp.float32, -lim1, lim1),
        "b1": jax.random.uniform(k_b1, (cfg["d_model"],), jnp.float32, -lim1, lim1),
        "w2": jax.random.uniform(
            k_w2, (cfg["d_model"], cfg["vocab_size"]), jnp.float32, -lim2, lim2),
        "b2": jax.random.uniform(k_b2, (cfg["vocab_size"],), jnp.float32, -lim2, lim2),
    }


def pack_params(params, cfg=CONFIG):
    """One-time re-layout: fold embedding into W1, pad lanes to 128, bf16 matmul weights."""
    V, E = cfg["vocab_size"], cfg["emb_size"]
    CTX, D = cfg["context_window"], cfg["d_model"]
    DP, VP = _round_up(D, LANE), _round_up(V, LANE)

    w1 = params["w1"].reshape(CTX, E, D)                 # rows [t*E:(t+1)*E] per position
    folded = jnp.einsum("ve,ted->tvd", params["embedding"], w1)   # (CTX, V, D) f32
    folded_p = jnp.zeros((CTX * V, DP), jnp.float32).at[:, :D].set(
        folded.reshape(CTX * V, D))
    w2_p = jnp.zeros((DP, VP), jnp.float32).at[:D, :V].set(params["w2"])
    b1_p = jnp.zeros((1, DP), jnp.float32).at[0, :D].set(params["b1"])
    b2_p = jnp.zeros((1, VP), jnp.float32).at[0, :V].set(params["b2"])
    return {
        "folded": folded_p.astype(jnp.bfloat16),   # MXU operands in bf16
        "w2": w2_p.astype(jnp.bfloat16),
        "b1": b1_p,                                # element-wise math stays f32 (v5e)
        "b2": b2_p,
    }


# --------------------------------------------------------------------------
# References
# --------------------------------------------------------------------------
def reference_forward(params, idx, cfg=CONFIG):
    """Pure-f32 mirror of the PyTorch forward."""
    x = jnp.take(params["embedding"], idx, axis=0)
    x = x.reshape(idx.shape[0], cfg["emb_size"] * cfg["context_window"])
    h = jnp.tanh(x @ params["w1"] + params["b1"])
    return h @ params["w2"] + params["b2"]


def quantized_reference(packed, idx, cfg=CONFIG):
    """Mirrors the kernel numerics (bf16 matmul operands, f32 accumulation)."""
    V, CTX = cfg["vocab_size"], cfg["context_window"]
    folded = packed["folded"].astype(jnp.float32)
    rows = idx + (jnp.arange(CTX, dtype=jnp.int32) * V)[None, :]
    h_pre = jnp.take(folded, rows, axis=0).sum(axis=1) + packed["b1"][0]
    h = jnp.tanh(h_pre).astype(jnp.bfloat16).astype(jnp.float32)
    logits = h @ packed["w2"].astype(jnp.float32) + packed["b2"][0]
    return logits[:, :V]


# --------------------------------------------------------------------------
if __name__ == "__main__":
    key = jax.random.PRNGKey(0)
    k_params, k_idx, k_tgt = jax.random.split(key, 3)

    B = 8
    params = init_params(k_params, CONFIG)
    packed = pack_params(params, CONFIG)

    idx = jax.random.randint(
        k_idx, (B, CONFIG["context_window"]), 0, CONFIG["vocab_size"], dtype=jnp.int32)
    targets = jax.random.randint(
        k_tgt, (B,), 0, CONFIG["vocab_size"], dtype=jnp.int32)

    logits, loss = simple_model_forward(packed, idx, targets)
    jax.block_until_ready((logits, loss))
    assert logits.shape == (B, CONFIG["vocab_size"])
    assert loss.shape == ()

    # Kernel vs numerics-matched (bf16-weight) reference: tight tolerance.
    q_ref = quantized_reference(packed, idx)
    assert bool(jnp.allclose(logits, q_ref, atol=2e-3, rtol=2e-3))

    # Kernel vs pure-f32 PyTorch-equivalent forward: bf16-weight tolerance.
    f_ref = reference_forward(params, idx)
    assert bool(jnp.allclose(logits, f_ref, atol=3e-2, rtol=3e-2))

    # Fused cross-entropy vs XLA cross-entropy on the kernel's own logits.
    logz = jax.nn.log_softmax(logits, axis=-1)
    ref_loss = -jnp.mean(jnp.take_along_axis(logz, targets[:, None], axis=-1)[:, 0])
    assert bool(jnp.allclose(loss, ref_loss, atol=1e-4, rtol=1e-4))

    # Inference path (no targets) matches the training-path logits.
    logits_inf = simple_model_forward(packed, idx)
    jax.block_until_ready(logits_inf)
    assert bool(jnp.allclose(logits_inf, logits, atol=1e-6))

    # Ragged batch exercises the padded last tile + loss-row masking.
    B2 = 13
    idx2 = jax.random.randint(jax.random.PRNGKey(1), (B2, CONFIG["context_window"]),
                              0, CONFIG["vocab_size"], dtype=jnp.int32)
    tgt2 = jax.random.randint(jax.random.PRNGKey(2), (B2,), 0,
                              CONFIG["vocab_size"], dtype=jnp.int32)
    logits2, loss2 = simple_model_forward(packed, idx2, tgt2)
    jax.block_until_ready((logits2, loss2))
    assert logits2.shape == (B2, CONFIG["vocab_size"])
    q_ref2 = quantized_reference(packed, idx2)
    assert bool(jnp.allclose(logits2, q_ref2, atol=2e-3, rtol=2e-3))
    logz2 = jax.nn.log_softmax(logits2, axis=-1)
    ref_loss2 = -jnp.mean(jnp.take_along_axis(logz2, tgt2[:, None], axis=-1)[:, 0])
    assert bool(jnp.allclose(loss2, ref_loss2, atol=1e-4, rtol=1e-4))

    print("KERNEL_OK")
</pallas_src>

<mosaic_0001>
module attributes {stable_mosaic.version = 11 : i64} {
  func.func @_train_kernel(%arg0: i32, %arg1: memref<8x8xi32, #tpu.memory_space<vmem>>, %arg2: memref<8x1xi32, #tpu.memory_space<vmem>>, %arg3: memref<256x128xbf16, #tpu.memory_space<vmem>>, %arg4: memref<1x128xf32, #tpu.memory_space<vmem>>, %arg5: memref<128x128xbf16, #tpu.memory_space<vmem>>, %arg6: memref<1x128xf32, #tpu.memory_space<vmem>>, %arg7: memref<8x128xf32, #tpu.memory_space<vmem>>, %arg8: memref<8x1xf32, #tpu.memory_space<vmem>>) attributes {dimension_semantics = [#tpu.dimension_semantics<parallel>], iteration_bounds = array<i64: 1>, scalar_prefetch = 0 : i64, scratch_operands = 0 : i64, tpu.core_type = #tpu.core_type<tc>, window_params = [{transform_indices = @transform_0, window_bounds = array<i64: 8, 8>}, {transform_indices = @transform_1, window_bounds = array<i64: 8, 1>}, {pipeline_mode = #tpu.pipeline_mode<synchronous>, transform_indices = @transform_2, window_bounds = array<i64: 256, 128>}, {pipeline_mode = #tpu.pipeline_mode<synchronous>, transform_indices = @transform_3, window_bounds = array<i64: 1, 128>}, {pipeline_mode = #tpu.pipeline_mode<synchronous>, transform_indices = @transform_4, window_bounds = array<i64: 128, 128>}, {pipeline_mode = #tpu.pipeline_mode<synchronous>, transform_indices = @transform_5, window_bounds = array<i64: 1, 128>}, {transform_indices = @transform_6, window_bounds = array<i64: 8, 128>}, {transform_indices = @transform_7, window_bounds = array<i64: 8, 1>}]} {
    %c0 = arith.constant 0 : index
    %c0_0 = arith.constant 0 : index
    %0 = vector.load %arg1[%c0, %c0_0] : memref<8x8xi32, #tpu.memory_space<vmem>>, vector<8x8xi32>
    %1 = tpu.iota {dimensions = array<i32: 1>} : vector<1x8xi32>
    %c32_i32 = arith.constant 32 : i32
    %2 = vector.broadcast %c32_i32 : i32 to vector<1x8xi32>
    %3 = arith.muli %1, %2 : vector<1x8xi32>
    %4 = vector.broadcast %3 : vector<1x8xi32> to vector<8x8xi32>
    %5 = arith.addi %0, %4 : vector<8x8xi32>
    %6 = tpu.iota {dimensions = array<i32: 1>} : vector<8x256xi32>
    %cst = arith.constant 0.000000e+00 : f32
    %7 = vector.broadcast %cst : f32 to vector<8x256xf32>
    %8 = vector.extract_strided_slice %5 {offsets = [0, 0], sizes = [8, 1], strides = [1, 1]} : vector<8x8xi32> to vector<8x1xi32>
    %9 = vector.broadcast %8 : vector<8x1xi32> to vector<8x256xi32>
    %10 = arith.cmpi eq, %6, %9 : vector<8x256xi32>
    %11 = arith.extui %10 : vector<8x256xi1> to vector<8x256xi32>
    %12 = arith.sitofp %11 : vector<8x256xi32> to vector<8x256xf32>
    %13 = arith.addf %7, %12 : vector<8x256xf32>
    %14 = vector.extract_strided_slice %5 {offsets = [0, 1], sizes = [8, 1], strides = [1, 1]} : vector<8x8xi32> to vector<8x1xi32>
    %15 = vector.broadcast %14 : vector<8x1xi32> to vector<8x256xi32>
    %16 = arith.cmpi eq, %6, %15 : vector<8x256xi32>
    %17 = arith.extui %16 : vector<8x256xi1> to vector<8x256xi32>
    %18 = arith.sitofp %17 : vector<8x256xi32> to vector<8x256xf32>
    %19 = arith.addf %13, %18 : vector<8x256xf32>
    %20 = vector.extract_strided_slice %5 {offsets = [0, 2], sizes = [8, 1], strides = [1, 1]} : vector<8x8xi32> to vector<8x1xi32>
    %21 = vector.broadcast %20 : vector<8x1xi32> to vector<8x256xi32>
    %22 = arith.cmpi eq, %6, %21 : vector<8x256xi32>
    %23 = arith.extui %22 : vector<8x256xi1> to vector<8x256xi32>
    %24 = arith.sitofp %23 : vector<8x256xi32> to vector<8x256xf32>
    %25 = arith.addf %19, %24 : vector<8x256xf32>
    %26 = vector.extract_strided_slice %5 {offsets = [0, 3], sizes = [8, 1], strides = [1, 1]} : vector<8x8xi32> to vector<8x1xi32>
    %27 = vector.broadcast %26 : vector<8x1xi32> to vector<8x256xi32>
    %28 = arith.cmpi eq, %6, %27 : vector<8x256xi32>
    %29 = arith.extui %28 : vector<8x256xi1> to vector<8x256xi32>
    %30 = arith.sitofp %29 : vector<8x256xi32> to vector<8x256xf32>
    %31 = arith.addf %25, %30 : vector<8x256xf32>
    %32 = vector.extract_strided_slice %5 {offsets = [0, 4], sizes = [8, 1], strides = [1, 1]} : vector<8x8xi32> to vector<8x1xi32>
    %33 = vector.broadcast %32 : vector<8x1xi32> to vector<8x256xi32>
    %34 = arith.cmpi eq, %6, %33 : vector<8x256xi32>
    %35 = arith.extui %34 : vector<8x256xi1> to vector<8x256xi32>
    %36 = arith.sitofp %35 : vector<8x256xi32> to vector<8x256xf32>
    %37 = arith.addf %31, %36 : vector<8x256xf32>
    %38 = vector.extract_strided_slice %5 {offsets = [0, 5], sizes = [8, 1], strides = [1, 1]} : vector<8x8xi32> to vector<8x1xi32>
    %39 = vector.broadcast %38 : vector<8x1xi32> to vector<8x256xi32>
    %40 = arith.cmpi eq, %6, %39 : vector<8x256xi32>
    %41 = arith.extui %40 : vector<8x256xi1> to vector<8x256xi32>
    %42 = arith.sitofp %41 : vector<8x256xi32> to vector<8x256xf32>
    %43 = arith.addf %37, %42 : vector<8x256xf32>
    %44 = vector.extract_strided_slice %5 {offsets = [0, 6], sizes = [8, 1], strides = [1, 1]} : vector<8x8xi32> to vector<8x1xi32>
    %45 = vector.broadcast %44 : vector<8x1xi32> to vector<8x256xi32>
    %46 = arith.cmpi eq, %6, %45 : vector<8x256xi32>
    %47 = arith.extui %46 : vector<8x256xi1> to vector<8x256xi32>
    %48 = arith.sitofp %47 : vector<8x256xi32> to vector<8x256xf32>
    %49 = arith.addf %43, %48 : vector<8x256xf32>
    %50 = vector.extract_strided_slice %5 {offsets = [0, 7], sizes = [8, 1], strides = [1, 1]} : vector<8x8xi32> to vector<8x1xi32>
    %51 = vector.broadcast %50 : vector<8x1xi32> to vector<8x256xi32>
    %52 = arith.cmpi eq, %6, %51 : vector<8x256xi32>
    %53 = arith.extui %52 : vector<8x256xi1> to vector<8x256xi32>
    %54 = arith.sitofp %53 : vector<8x256xi32> to vector<8x256xf32>
    %55 = arith.addf %49, %54 : vector<8x256xf32>
    %56 = arith.truncf %55 : vector<8x256xf32> to vector<8x256xbf16>
    %c0_1 = arith.constant 0 : index
    %c0_2 = arith.constant 0 : index
    %57 = vector.load %arg3[%c0_1, %c0_2] : memref<256x128xbf16, #tpu.memory_space<vmem>>, vector<256x128xbf16>
    %cst_3 = arith.constant dense<0.000000e+00> : vector<8x128xf32>
    %58 = tpu.matmul %56, %57, %cst_3 {dimension_numbers = #tpu.dot_dimension_numbers<[1], [0], [0], [1], [0, 0, 1, 1], [], []>} : vector<8x256xbf16>, vector<256x128xbf16>, vector<8x128xf32> -> vector<8x128xf32>
    %c0_4 = arith.constant 0 : index
    %c0_5 = arith.constant 0 : index
    %59 = vector.load %arg4[%c0_4, %c0_5] : memref<1x128xf32, #tpu.memory_space<vmem>>, vector<1x128xf32>
    %60 = vector.broadcast %59 : vector<1x128xf32> to vector<8x128xf32>
    %61 = arith.addf %58, %60 : vector<8x128xf32>
    %62 = math.tanh %61 : vector<8x128xf32>
    %63 = arith.truncf %62 : vector<8x128xf32> to vector<8x128xbf16>
    %c0_6 = arith.constant 0 : index
    %c0_7 = arith.constant 0 : index
    %64 = vector.load %arg5[%c0_6, %c0_7] : memref<128x128xbf16, #tpu.memory_space<vmem>>, vector<128x128xbf16>
    %cst_8 = arith.constant dense<0.000000e+00> : vector<8x128xf32>
    %65 = tpu.matmul %63, %64, %cst_8 {dimension_numbers = #tpu.dot_dimension_numbers<[1], [0], [0], [1], [0, 0, 1, 1], [], []>} : vector<8x128xbf16>, vector<128x128xbf16>, vector<8x128xf32> -> vector<8x128xf32>
    %c0_9 = arith.constant 0 : index
    %c0_10 = arith.constant 0 : index
    %66 = vector.load %arg6[%c0_9, %c0_10] : memref<1x128xf32, #tpu.memory_space<vmem>>, vector<1x128xf32>
    %67 = vector.broadcast %66 : vector<1x128xf32> to vector<8x128xf32>
    %68 = arith.addf %65, %67 : vector<8x128xf32>
    %c0_11 = arith.constant 0 : index
    %c0_12 = arith.constant 0 : index
    %69 = vector.load %arg7[%c0_11, %c0_12] : memref<8x128xf32, #tpu.memory_space<vmem>>, vector<8x128xf32>
    tpu.vector_store %arg7[%c0_11, %c0_12], %68 {strides = array<i32>} : memref<8x128xf32, #tpu.memory_space<vmem>>, vector<8x128xf32>,
    %70 = tpu.iota {dimensions = array<i32: 1>} : vector<8x128xi32>
    %c32_i32_13 = arith.constant 32 : i32
    %71 = vector.broadcast %c32_i32_13 : i32 to vector<8x128xi32>
    %72 = arith.cmpi slt, %70, %71 : vector<8x128xi32>
    %cst_14 = arith.constant -1.000000e+30 : f32
    %73 = vector.broadcast %cst_14 : f32 to vector<8x128xf32>
    %74 = arith.select %72, %68, %73 : vector<8x128xi1>, vector<8x128xf32>
    %cst_15 = arith.constant dense<0xFF800000> : vector<8xf32>
    %75 = vector.multi_reduction <maximumf>, %74, %cst_15 [1] : vector<8x128xf32> to vector<8xf32>
    %76 = vector.shape_cast %75 : vector<8xf32> to vector<8x1xf32>
    %77 = vector.broadcast %76 : vector<8x1xf32> to vector<8x128xf32>
    %78 = arith.subf %74, %77 : vector<8x128xf32>
    %79 = math.exp %78 : vector<8x128xf32>
    %cst_16 = arith.constant dense<0.000000e+00> : vector<8xf32>
    %80 = vector.multi_reduction <add>, %79, %cst_16 [1] : vector<8x128xf32> to vector<8xf32>
    %81 = vector.shape_cast %80 : vector<8xf32> to vector<8x1xf32>
    %82 = math.log %81 : vector<8x1xf32>
    %83 = arith.addf %76, %82 : vector<8x1xf32>
    %c0_17 = arith.constant 0 : index
    %c0_18 = arith.constant 0 : index
    %84 = vector.load %arg2[%c0_17, %c0_18] : memref<8x1xi32, #tpu.memory_space<vmem>>, vector<8x1xi32>
    %85 = vector.broadcast %84 : vector<8x1xi32> to vector<8x128xi32>
    %86 = arith.cmpi eq, %70, %85 : vector<8x128xi32>
    %cst_19 = arith.constant 0.000000e+00 : f32
    %87 = vector.broadcast %cst_19 : f32 to vector<8x128xf32>
    %88 = arith.select %86, %68, %87 : vector<8x128xi1>, vector<8x128xf32>
    %cst_20 = arith.constant dense<0.000000e+00> : vector<8xf32>
    %89 = vector.multi_reduction <add>, %88, %cst_20 [1] : vector<8x128xf32> to vector<8xf32>
    %90 = vector.shape_cast %89 : vector<8xf32> to vector<8x1xf32>
    %91 = arith.subf %83, %90 : vector<8x1xf32>
    %c0_21 = arith.constant 0 : index
    %c0_22 = arith.constant 0 : index
    %92 = vector.load %arg8[%c0_21, %c0_22] : memref<8x1xf32, #tpu.memory_space<vmem>>, vector<8x1xf32>
    tpu.vector_store %arg8[%c0_21, %c0_22], %91 {strides = array<i32>} : memref<8x1xf32, #tpu.memory_space<vmem>>, vector<8x1xf32>,
    return
  }
  func.func @transform_0(%arg0: i32) -> (i32, i32) {
    %c0_i32 = arith.constant 0 : i32
    %c0_i32_0 = arith.constant 0 : i32
    return %arg0, %c0_i32 : i32, i32
  }
  func.func @transform_1(%arg0: i32) -> (i32, i32) {
    %c0_i32 = arith.constant 0 : i32
    %c0_i32_0 = arith.constant 0 : i32
    return %arg0, %c0_i32 : i32, i32
  }
  func.func @transform_2(%arg0: i32) -> (i32, i32) {
    %c0_i32 = arith.constant 0 : i32
    %c0_i32_0 = arith.constant 0 : i32
    %c0_i32_1 = arith.constant 0 : i32
    return %c0_i32, %c0_i32_0 : i32, i32
  }
  func.func @transform_3(%arg0: i32) -> (i32, i32) {
    %c0_i32 = arith.constant 0 : i32
    %c0_i32_0 = arith.constant 0 : i32
    %c0_i32_1 = arith.constant 0 : i32
    return %c0_i32, %c0_i32_0 : i32, i32
  }
  func.func @transform_4(%arg0: i32) -> (i32, i32) {
    %c0_i32 = arith.constant 0 : i32
    %c0_i32_0 = arith.constant 0 : i32
    %c0_i32_1 = arith.constant 0 : i32
    return %c0_i32, %c0_i32_0 : i32, i32
  }
  func.func @transform_5(%arg0: i32) -> (i32, i32) {
    %c0_i32 = arith.constant 0 : i32
    %c0_i32_0 = arith.constant 0 : i32
    %c0_i32_1 = arith.constant 0 : i32
    return %c0_i32, %c0_i32_0 : i32, i32
  }
  func.func @transform_6(%arg0: i32) -> (i32, i32) {
    %c0_i32 = arith.constant 0 : i32
    %c0_i32_0 = arith.constant 0 : i32
    return %arg0, %c0_i32 : i32, i32
  }
  func.func @transform_7(%arg0: i32) -> (i32, i32) {
    %c0_i32 = arith.constant 0 : i32
    %c0_i32_0 = arith.constant 0 : i32
    return %arg0, %c0_i32 : i32, i32
  }
}

</mosaic_0001>

<llo_original>
// kernel: tpu_custom_call.1
$region0: #{tpu_custom_call.1}
  #allocation0 [shape = 'u32[]', space=smem, size = 0x4, offset = 0x4, fixed_abs, tag = 'smem constant byte address 0x4 - core index']
  #allocation1 [shape = 'u32[144,128]{1,0:T(1,128)}', space=vmem, size = 0x12000, scoped, tag = 'internal scratch']
  %s0 = inlined_call_operand.vmem [shape: s32[8,8], index: 0, kind: input, shape index: {}]
  %s1 = inlined_call_operand.vmem [shape: s32[8,1], index: 1, kind: input, shape index: {}]
  %s2 = inlined_call_operand.hbm [shape: bf16[256,128], index: 2, kind: input, shape index: {}]
  %s3 = inlined_call_operand.vmem [shape: f32[1,128], index: 3, kind: input, shape index: {}]
  %s4 = inlined_call_operand.hbm [shape: bf16[128,128], index: 4, kind: input, shape index: {}]
  %s5 = inlined_call_operand.vmem [shape: f32[1,128], index: 5, kind: input, shape index: {}]
  %s6 = inlined_call_operand.hbm [shape: f32[8,128], index: 6, kind: output, shape index: {0}]
  %s7 = inlined_call_operand.vmem [shape: f32[8,1], index: 7, kind: output, shape index: {1}]
  %8 = xla_tuple %s6, %s7
  %s9 = sld [smem:[#allocation0]]
  $region50: #{tpu_custom_call.1} parent=0
    _
  %s11 = ssub.s32 1, %s9
  %s12 = scalar_select 0, %s11, %s9
  $region1: #{tpu_custom_call.1} parent=0
    #allocation2 [shape = 'u8[65536]{0}', space=vmem, size = 0x10000, scoped, tag = 'input window, operand 2, single buffered']
    #allocation3 [shape = 's32[1]{0}', space=sflag, size = 0x4, scoped, tag = 'scoped memory for tpu_custom_call.1']
    #allocation4 [shape = 's32[1]{0}', space=sflag, size = 0x4, scoped, tag = 'scoped memory for tpu_custom_call.1']
    #allocation5 [shape = 'u8[32768]{0}', space=vmem, size = 0x8000, scoped, tag = 'input window, operand 4, single buffered']
    #allocation6 [shape = 's32[1]{0}', space=sflag, size = 0x4, scoped, tag = 'scoped memory for tpu_custom_call.1']
    #allocation7 [shape = 'u8[4096]{0}', space=vmem, size = 0x1000, scoped, tag = 'output window, operand 0, single buffered']
    %13 = vsyncpa [#allocation3], 0
    %14 = vsyncpa [#allocation6], 0
    %15 = vsyncpa [#allocation4], 0
    // Predicated region
    $region2: #{tpu_custom_call.1} parent=1 // pred_check
      _
    $region3: #{tpu_custom_call.1} parent=1 // pred_check_branch
      %17 = sbr.rel (0) target = $region5
    $region4: #{tpu_custom_call.1} parent=1 // pred_region
      _
    $region5: #{tpu_custom_call.1} parent=1 // pred_fallthru
      _
    // Predicated region
    $region6: #{tpu_custom_call.1} parent=1 // pred_check
      _
    $region7: #{tpu_custom_call.1} parent=1 // pred_check_branch
      %19 = sbr.rel (0) target = $region9
    $region8: #{tpu_custom_call.1} parent=1 // pred_region
      _
    $region9: #{tpu_custom_call.1} parent=1 // pred_fallthru
      _
    // Predicated region
    $region10: #{tpu_custom_call.1} parent=1 // pred_check
      _
    $region11: #{tpu_custom_call.1} parent=1 // pred_check_branch
      %21 = sbr.rel (0) target = $region13
    $region12: #{tpu_custom_call.1} parent=1 // pred_region
      %s23 = ssub.s32 2048, 2048
      %24 = vsyncadd [#allocation3], %s23
      %s25 = sshll.u32 [#allocation2], 4
      %s26 = int_to_ptr.vmem [resolvable:$true] %s25
      %31 = dma.hbm_to_vmem [thread:$0]  %s2, 2048, %s26, [#allocation3], 64, 64, 4
    $region13: #{tpu_custom_call.1} parent=1 // pred_fallthru
      _
    // Predicated region
    $region14: #{tpu_custom_call.1} parent=1 // pred_check
      _
    $region15: #{tpu_custom_call.1} parent=1 // pred_check_branch
      %33 = sbr.rel (0) target = $region17
    $region16: #{tpu_custom_call.1} parent=1 // pred_region
      _
    $region17: #{tpu_custom_call.1} parent=1 // pred_fallthru
      _
    // Predicated region
    $region18: #{tpu_custom_call.1} parent=1 // pred_check
      _
    $region19: #{tpu_custom_call.1} parent=1 // pred_check_branch
      %35 = sbr.rel (0) target = $region21
    $region20: #{tpu_custom_call.1} parent=1 // pred_region
      %s37 = ssub.s32 1024, 1024
      %38 = vsyncadd [#allocation6], %s37
      %s39 = sshll.u32 [#allocation5], 4
      %s40 = int_to_ptr.vmem [resolvable:$true] %s39
      %45 = dma.hbm_to_vmem [thread:$0]  %s4, 1024, %s40, [#allocation6], 64, 64, 4
    $region21: #{tpu_custom_call.1} parent=1 // pred_fallthru
      _
    // Predicated region
    $region22: #{tpu_custom_call.1} parent=1 // pred_check
      _
    $region23: #{tpu_custom_call.1} parent=1 // pred_check_branch
      %47 = sbr.rel (0) target = $region25
    $region24: #{tpu_custom_call.1} parent=1 // pred_region
      _
    $region25: #{tpu_custom_call.1} parent=1 // pred_fallthru
      _
    // Predicated region
    $region26: #{tpu_custom_call.1} parent=1 // pred_check
      _
    $region27: #{tpu_custom_call.1} parent=1 // pred_check_branch
      %49 = sbr.rel (0) target = $region29
    $region28: #{tpu_custom_call.1} parent=1 // pred_region
      %50 = dma.done [#allocation3], 2048
    $region29: #{tpu_custom_call.1} parent=1 // pred_fallthru
      _
    // Predicated region
    $region30: #{tpu_custom_call.1} parent=1 // pred_check
      _
    $region31: #{tpu_custom_call.1} parent=1 // pred_check_branch
      %52 = sbr.rel (0) target = $region33
    $region32: #{tpu_custom_call.1} parent=1 // pred_region
      %53 = dma.done [#allocation6], 1024
    $region33: #{tpu_custom_call.1} parent=1 // pred_fallthru
      _
    %v55 = vld [vmem:[%s0] sm:$0xff]
    %v56 = vlaneseq
    %v57 = vand.u32 %v56, 127
    %v58 = vmul.u32 %v57, 32
    %v59 = vadd.s32 %v55, %v58
    %v60 = vadd.s32 %v57, 128
    %61 = vset.pattern.permute.xlu0 0
    %62 = vperm.xlu0 %61, %v59
    %v63 = vpop.permute.xlu0 %62
    %vm64 = vcmp.eq.s32.totalorder %v57, %v63
    %vm65 = vcmp.eq.s32.totalorder %v60, %v63
    %v66 = vsel %vm64, 1, 0
    %v67 = vsel %vm65, 1, 0
    %v68 = vcvt.s32.f32 %v66
    %v69 = vcvt.s32.f32 %v67
    %v70 = vadd.f32 %v68, 0.0
    %v71 = vadd.f32 %v69, 0.0
    %72 = vset.pattern.permute.xlu0 1
    %73 = vperm.xlu0 %72, %v59
    %v74 = vpop.permute.xlu0 %73
    %vm75 = vcmp.eq.s32.totalorder %v57, %v74
    %vm76 = vcmp.eq.s32.totalorder %v60, %v74
    %v77 = vsel %vm75, 1, 0
    %v78 = vsel %vm76, 1, 0
    %v79 = vcvt.s32.f32 %v77
    %v80 = vcvt.s32.f32 %v78
    %v81 = vadd.f32 %v70, %v79
    %v82 = vadd.f32 %v71, %v80
    %83 = vset.pattern.permute.xlu0 2
    %84 = vperm.xlu0 %83, %v59
    %v85 = vpop.permute.xlu0 %84
    %vm86 = vcmp.eq.s32.totalorder %v57, %v85
    %vm87 = vcmp.eq.s32.totalorder %v60, %v85
    %v88 = vsel %vm86, 1, 0
    %v89 = vsel %vm87, 1, 0
    %v90 = vcvt.s32.f32 %v88
    %v91 = vcvt.s32.f32 %v89
    %v92 = vadd.f32 %v81, %v90
    %v93 = vadd.f32 %v82, %v91
    %94 = vset.pattern.permute.xlu0 3
    %95 = vperm.xlu0 %94, %v59
    %v96 = vpop.permute.xlu0 %95
    %vm97 = vcmp.eq.s32.totalorder %v57, %v96
    %vm98 = vcmp.eq.s32.totalorder %v60, %v96
    %v99 = vsel %vm97, 1, 0
    %v100 = vsel %vm98, 1, 0
    %v101 = vcvt.s32.f32 %v99
    %v102 = vcvt.s32.f32 %v100
    %v103 = vadd.f32 %v92, %v101
    %v104 = vadd.f32 %v93, %v102
    %105 = vset.pattern.permute.xlu0 4
    %106 = vperm.xlu0 %105, %v59
    %v107 = vpop.permute.xlu0 %106
    %vm108 = vcmp.eq.s32.totalorder %v57, %v107
    %vm109 = vcmp.eq.s32.totalorder %v60, %v107
    %v110 = vsel %vm108, 1, 0
    %v111 = vsel %vm109, 1, 0
    %v112 = vcvt.s32.f32 %v110
    %v113 = vcvt.s32.f32 %v111
    %v114 = vadd.f32 %v103, %v112
    %v115 = vadd.f32 %v104, %v113
    %116 = vset.pattern.permute.xlu0 5
    %117 = vperm.xlu0 %116, %v59
    %v118 = vpop.permute.xlu0 %117
    %vm119 = vcmp.eq.s32.totalorder %v57, %v118
    %vm120 = vcmp.eq.s32.totalorder %v60, %v118
    %v121 = vsel %vm119, 1, 0
    %v122 = vsel %vm120, 1, 0
    %v123 = vcvt.s32.f32 %v121
    %v124 = vcvt.s32.f32 %v122
    %v125 = vadd.f32 %v114, %v123
    %v126 = vadd.f32 %v115, %v124
    %127 = vset.pattern.permute.xlu0 6
    %128 = vperm.xlu0 %127, %v59
    %v129 = vpop.permute.xlu0 %128
    %vm130 = vcmp.eq.s32.totalorder %v57, %v129
    %vm131 = vcmp.eq.s32.totalorder %v60, %v129
    %v132 = vsel %vm130, 1, 0
    %v133 = vsel %vm131, 1, 0
    %v134 = vcvt.s32.f32 %v132
    %v135 = vcvt.s32.f32 %v133
    %v136 = vadd.f32 %v125, %v134
    %v137 = vadd.f32 %v126, %v135
    %138 = vset.pattern.permute.xlu0 7
    %139 = vperm.xlu0 %138, %v59
    %v140 = vpop.permute.xlu0 %139
    %vm141 = vcmp.eq.s32.totalorder %v57, %v140
    %vm142 = vcmp.eq.s32.totalorder %v60, %v140
    %v143 = vsel %vm141, 1, 0
    %v144 = vsel %vm142, 1, 0
    %v145 = vcvt.s32.f32 %v143
    %v146 = vcvt.s32.f32 %v144
    %v147 = vadd.f32 %v136, %v145
    %v148 = vadd.f32 %v137, %v146
    %v149 = vpack.c.bf16 %v147, %v147
    %v150 = vpack.c.bf16 %v148, %v148
    %v151 = vld [vmem:[#allocation2] sm:$0xf]
    %v152 = vld [vmem:[#allocation2 + $0x4] sm:$0xf]
    %v153 = vld [vmem:[#allocation2 + $0x8] sm:$0xf]
    %v154 = vld [vmem:[#allocation2 + $0xc] sm:$0xf]
    %v155 = vld [vmem:[#allocation2 + $0x10] sm:$0xf]
    %v156 = vld [vmem:[#allocation2 + $0x14] sm:$0xf]
    %v157 = vld [vmem:[#allocation2 + $0x18] sm:$0xf]
    %v158 = vld [vmem:[#allocation2 + $0x1c] sm:$0xf]
    %v159 = vld [vmem:[#allocation2 + $0x20] sm:$0xf]
    %v160 = vld [vmem:[#allocation2 + $0x24] sm:$0xf]
    %v161 = vld [vmem:[#allocation2 + $0x28] sm:$0xf]
    %v162 = vld [vmem:[#allocation2 + $0x2c] sm:$0xf]
    %v163 = vld [vmem:[#allocation2 + $0x30] sm:$0xf]
    %v164 = vld [vmem:[#allocation2 + $0x34] sm:$0xf]
    %v165 = vld [vmem:[#allocation2 + $0x38] sm:$0xf]
    %v166 = vld [vmem:[#allocation2 + $0x3c] sm:$0xf]
    %v167 = vld [vmem:[#allocation2 + $0x40] sm:$0xf]
    %v168 = vld [vmem:[#allocation2 + $0x44] sm:$0xf]
    %v169 = vld [vmem:[#allocation2 + $0x48] sm:$0xf]
    %v170 = vld [vmem:[#allocation2 + $0x4c] sm:$0xf]
    %v171 = vld [vmem:[#allocation2 + $0x50] sm:$0xf]
    %v172 = vld [vmem:[#allocation2 + $0x54] sm:$0xf]
    %v173 = vld [vmem:[#allocation2 + $0x58] sm:$0xf]
    %v174 = vld [vmem:[#allocation2 + $0x5c] sm:$0xf]
    %v175 = vld [vmem:[#allocation2 + $0x60] sm:$0xf]
    %v176 = vld [vmem:[#allocation2 + $0x64] sm:$0xf]
    %v177 = vld [vmem:[#allocation2 + $0x68] sm:$0xf]
    %v178 = vld [vmem:[#allocation2 + $0x6c] sm:$0xf]
    %v179 = vld [vmem:[#allocation2 + $0x70] sm:$0xf]
    %v180 = vld [vmem:[#allocation2 + $0x74] sm:$0xf]
    %v181 = vld [vmem:[#allocation2 + $0x78] sm:$0xf]
    %v182 = vld [vmem:[#allocation2 + $0x7c] sm:$0xf]
    %v183 = vld [vmem:[%s3] sm:$0x1]
    %v185 = vlaneseq
    %v186 = vshrl.u32 %v185, 7
    %v187 = vsub.s32 0, %v186
    %v188 = vrot.slane %v183, %v187
    %v222 = vunpack.c.l.b16 %v151
    %v223 = vunpack.c.l.b16 %v152
    %v224 = vunpack.c.l.b16 %v153
    %v225 = vunpack.c.l.b16 %v154
    %v226 = vunpack.c.l.b16 %v155
    %v227 = vunpack.c.l.b16 %v156
    %v228 = vunpack.c.l.b16 %v157
    %v229 = vunpack.c.l.b16 %v158
    %v230 = vunpack.c.l.b16 %v159
    %v231 = vunpack.c.l.b16 %v160
    %v232 = vunpack.c.l.b16 %v161
    %v233 = vunpack.c.l.b16 %v162
    %v234 = vunpack.c.l.b16 %v163
    %v235 = vunpack.c.l.b16 %v164
    %v236 = vunpack.c.l.b16 %v165
    %v237 = vunpack.c.l.b16 %v166
    %v238 = vunpack.c.l.b16 %v167
    %v239 = vunpack.c.l.b16 %v168
    %v240 = vunpack.c.l.b16 %v169
    %v241 = vunpack.c.l.b16 %v170
    %v242 = vunpack.c.l.b16 %v171
    %v243 = vunpack.c.l.b16 %v172
    %v244 = vunpack.c.l.b16 %v173
    %v245 = vunpack.c.l.b16 %v174
    %v246 = vunpack.c.l.b16 %v175
    %v247 = vunpack.c.l.b16 %v176
    %v248 = vunpack.c.l.b16 %v177
    %v249 = vunpack.c.l.b16 %v178
    %v250 = vunpack.c.l.b16 %v179
    %v251 = vunpack.c.l.b16 %v180
    %v252 = vunpack.c.l.b16 %v181
    %v253 = vunpack.c.l.b16 %v182
    %v254 = vpack.c.b16 %v223, %v222
    %v255 = vpack.c.b16 %v225, %v224
    %v256 = vpack.c.b16 %v227, %v226
    %v257 = vpack.c.b16 %v229, %v228
    %v258 = vpack.c.b16 %v231, %v230
    %v259 = vpack.c.b16 %v233, %v232
    %v260 = vpack.c.b16 %v235, %v234
    %v261 = vpack.c.b16 %v237, %v236
    %v262 = vpack.c.b16 %v239, %v238
    %v263 = vpack.c.b16 %v241, %v240
    %v264 = vpack.c.b16 %v243, %v242
    %v265 = vpack.c.b16 %v245, %v244
    %v266 = vpack.c.b16 %v247, %v246
    %v267 = vpack.c.b16 %v249, %v248
    %v268 = vpack.c.b16 %v251, %v250
    %v269 = vpack.c.b16 %v253, %v252
    %286 = vmatprep.subr.bf16.mxu0 0
    %287 = vmatpush1.bf16.msra.mxu0 %v254
    %288 = vmatprep.subr.bf16.mxu0 0
    %289 = vmatpush1.bf16.msra.mxu0 %v255
    %290 = vmatprep.subr.bf16.mxu0 0
    %291 = vmatpush1.bf16.msra.mxu0 %v256
    %292 = vmatprep.subr.bf16.mxu0 0
    %293 = vmatpush1.bf16.msra.mxu0 %v257
    %294 = vmatprep.subr.bf16.mxu0 0
    %295 = vmatpush1.bf16.msra.mxu0 %v258
    %296 = vmatprep.subr.bf16.mxu0 0
    %297 = vmatpush1.bf16.msra.mxu0 %v259
    %298 = vmatprep.subr.bf16.mxu0 0
    %299 = vmatpush1.bf16.msra.mxu0 %v260
    %300 = vmatprep.subr.bf16.mxu0 0
    %301 = vmatpush1.bf16.msra.mxu0 %v261
    %302 = vmatprep.subr.bf16.mxu0 0
    %303 = vmatpush1.bf16.msra.mxu0 %v262
    %304 = vmatprep.subr.bf16.mxu0 0
    %305 = vmatpush1.bf16.msra.mxu0 %v263
    %306 = vmatprep.subr.bf16.mxu0 0
    %307 = vmatpush1.bf16.msra.mxu0 %v264
    %308 = vmatprep.subr.bf16.mxu0 0
    %309 = vmatpush1.bf16.msra.mxu0 %v265
    %310 = vmatprep.subr.bf16.mxu0 0
    %311 = vmatpush1.bf16.msra.mxu0 %v266
    %312 = vmatprep.subr.bf16.mxu0 0
    %313 = vmatpush1.bf16.msra.mxu0 %v267
    %314 = vmatprep.subr.bf16.mxu0 0
    %315 = vmatpush1.bf16.msra.mxu0 %v268
    %316 = vmatprep.subr.bf16.mxu0 0
    %317 = vmatpush1.bf16.msra.mxu0 %v269
    %318 = vmatprep.mubr.bf16.mxu0 %v150
    %319 = vmatmul.mubr.bf16.gmra.mrb[0].mxu0 %v149
    %v320 = vpop.f32.mrb[0].mxu0
    %v321 = vadd.f32 %v188, %v320
    %v322 = vpop.f32.mrb[0].mxu0
    %v323 = vpop.f32.mrb[0].mxu0
    %v324 = vpop.f32.mrb[0].mxu0
    %325 = vdwg.mxu0
    %v326 = vtanh.pop %v321
    %v327 = vpack.c.bf16 %v326, %v326
    %v328 = vld [vmem:[#allocation5] sm:$0xf]
    %v329 = vld [vmem:[#allocation5 + $0x4] sm:$0xf]
    %v330 = vld [vmem:[#allocation5 + $0x8] sm:$0xf]
    %v331 = vld [vmem:[#allocation5 + $0xc] sm:$0xf]
    %v332 = vld [vmem:[#allocation5 + $0x10] sm:$0xf]
    %v333 = vld [vmem:[#allocation5 + $0x14] sm:$0xf]
    %v334 = vld [vmem:[#allocation5 + $0x18] sm:$0xf]
    %v335 = vld [vmem:[#allocation5 + $0x1c] sm:$0xf]
    %v336 = vld [vmem:[#allocation5 + $0x20] sm:$0xf]
    %v337 = vld [vmem:[#allocation5 + $0x24] sm:$0xf]
    %v338 = vld [vmem:[#allocation5 + $0x28] sm:$0xf]
    %v339 = vld [vmem:[#allocation5 + $0x2c] sm:$0xf]
    %v340 = vld [vmem:[#allocation5 + $0x30] sm:$0xf]
    %v341 = vld [vmem:[#allocation5 + $0x34] sm:$0xf]
    %v342 = vld [vmem:[#allocation5 + $0x38] sm:$0xf]
    %v343 = vld [vmem:[#allocation5 + $0x3c] sm:$0xf]
    %v344 = vld [vmem:[%s5] sm:$0x1]
    %v346 = vlaneseq
    %v347 = vshrl.u32 %v346, 7
    %v348 = vsub.s32 0, %v347
    %v349 = vrot.slane %v344, %v348
    %v367 = vunpack.c.l.b16 %v328
    %v368 = vunpack.c.l.b16 %v329
    %v369 = vunpack.c.l.b16 %v330
    %v370 = vunpack.c.l.b16 %v331
    %v371 = vunpack.c.l.b16 %v332
    %v372 = vunpack.c.l.b16 %v333
    %v373 = vunpack.c.l.b16 %v334
    %v374 = vunpack.c.l.b16 %v335
    %v375 = vunpack.c.l.b16 %v336
    %v376 = vunpack.c.l.b16 %v337
    %v377 = vunpack.c.l.b16 %v338
    %v378 = vunpack.c.l.b16 %v339
    %v379 = vunpack.c.l.b16 %v340
    %v380 = vunpack.c.l.b16 %v341
    %v381 = vunpack.c.l.b16 %v342
    %v382 = vunpack.c.l.b16 %v343
    %v383 = vpack.c.b16 %v368, %v367
    %v384 = vpack.c.b16 %v370, %v369
    %v385 = vpack.c.b16 %v372, %v371
    %v386 = vpack.c.b16 %v374, %v373
    %v387 = vpack.c.b16 %v376, %v375
    %v388 = vpack.c.b16 %v378, %v377
    %v389 = vpack.c.b16 %v380, %v379
    %v390 = vpack.c.b16 %v382, %v381
    %399 = vmatprep.subr.bf16.mxu0 0
    %400 = vmatpush1.bf16.msra.mxu0 %v383
    %401 = vmatprep.subr.bf16.mxu0 0
    %402 = vmatpush1.bf16.msra.mxu0 %v384
    %403 = vmatprep.subr.bf16.mxu0 0
    %404 = vmatpush1.bf16.msra.mxu0 %v385
    %405 = vmatprep.subr.bf16.mxu0 0
    %406 = vmatpush1.bf16.msra.mxu0 %v386
    %407 = vmatprep.subr.bf16.mxu0 0
    %408 = vmatpush1.bf16.msra.mxu0 %v387
    %409 = vmatprep.subr.bf16.mxu0 0
    %410 = vmatpush1.bf16.msra.mxu0 %v388
    %411 = vmatprep.subr.bf16.mxu0 0
    %412 = vmatpush1.bf16.msra.mxu0 %v389
    %413 = vmatprep.subr.bf16.mxu0 0
    %414 = vmatpush1.bf16.msra.mxu0 %v390
    %415 = vmatprep.subr.bf16.mxu0 0
    %416 = vmatpush1.bf16.msra.mxu0 0
    %417 = vmatprep.subr.bf16.mxu0 0
    %418 = vmatpush1.bf16.msra.mxu0 0
    %419 = vmatprep.subr.bf16.mxu0 0
    %420 = vmatpush1.bf16.msra.mxu0 0
    %421 = vmatprep.subr.bf16.mxu0 0
    %422 = vmatpush1.bf16.msra.mxu0 0
    %423 = vmatprep.subr.bf16.mxu0 0
    %424 = vmatpush1.bf16.msra.mxu0 0
    %425 = vmatprep.subr.bf16.mxu0 0
    %426 = vmatpush1.bf16.msra.mxu0 0
    %427 = vmatprep.subr.bf16.mxu0 0
    %428 = vmatpush1.bf16.msra.mxu0 0
    %429 = vmatprep.subr.bf16.mxu0 0
    %430 = vmatpush1.bf16.msra.mxu0 0
    %431 = vmatprep.mubr.bf16.mxu0 0
    %432 = vmatmul.mubr.bf16.gmra.mrb[0].mxu0 %v327
    %v433 = vpop.f32.mrb[0].mxu0
    %v434 = vadd.f32 %v349, %v433
    %v435 = vpop.f32.mrb[0].mxu0
    %v436 = vpop.f32.mrb[0].mxu0
    %v437 = vpop.f32.mrb[0].mxu0
    %438 = vdwg.mxu0
    %439 = vst [vmem:[#allocation7] sm:$0xff] %v434
    %vm440 = vcmp.lt.s32.totalorder %v57, 32
    %v441 = vsel %vm440, %v434, -1e+30
    %442 = vmax.xlane.f32.xlu0 %v441
    %v443 = vpop.xlane.xlu0 %442
    %v444 = vsub.f32 %v441, %v443
    %v445 = vmul.f32 %v444, 1.442695
    %v446 = vpow.pop %v445
    %447 = vadd.xlane.f32.xlu0 %v446
    %v448 = vpop.xlane.xlu0 %447
    %v449 = vlog2.pop %v448
    %v450 = vmul.f32 %v449, 0.6931472
    %v451 = vadd.f32 %v443, %v450
    %v452 = vld [vmem:[%s1] sm:$0xff]
    %453 = vset.pattern.permute.xlu0 0
    %454 = vperm.xlu0 %453, %v452
    %v455 = vpop.permute.xlu0 %454
    %vm456 = vcmp.eq.s32.totalorder %v57, %v455
    %v457 = vsel %vm456, %v434, 0.0
    %458 = vadd.xlane.f32.xlu0 %v457
    %v459 = vpop.xlane.xlu0 %458
    %v460 = vsub.f32 %v451, %v459
    %vm461 = vcmask 7168
    %462 = vst.msk [vmem:[%s7] sm:$0xff] %vm461, %v460
    // Predicated region
    $region34: #{tpu_custom_call.1} parent=1 // pred_check
      _
    $region35: #{tpu_custom_call.1} parent=1 // pred_check_branch
      %464 = sbr.rel (0) target = $region37
    $region36: #{tpu_custom_call.1} parent=1 // pred_region
      %s466 = ssub.s32 128, 128
      %467 = vsyncadd [#allocation4], %s466
      %s469 = sshll.u32 [#allocation7], 4
      %s470 = int_to_ptr.vmem [resolvable:$true] %s469
      %472 = dma.vmem_to_hbm [thread:$0]  %s470, 128, %s6, [#allocation4]
    $region37: #{tpu_custom_call.1} parent=1 // pred_fallthru
      _
    // Predicated region
    $region38: #{tpu_custom_call.1} parent=1 // pred_check
      _
    $region39: #{tpu_custom_call.1} parent=1 // pred_check_branch
      %474 = sbr.rel (0) target = $region41
    $region40: #{tpu_custom_call.1} parent=1 // pred_region
      _
    $region41: #{tpu_custom_call.1} parent=1 // pred_fallthru
      _
    // Predicated region
    $region42: #{tpu_custom_call.1} parent=1 // pred_check
      _
    $region43: #{tpu_custom_call.1} parent=1 // pred_check_branch
      %476 = sbr.rel (0) target = $region45
    $region44: #{tpu_custom_call.1} parent=1 // pred_region
      %477 = dma.done [#allocation4], 128
    $region45: #{tpu_custom_call.1} parent=1 // pred_fallthru
      _
    // Predicated region
    $region46: #{tpu_custom_call.1} parent=1 // pred_check
      _
    $region47: #{tpu_custom_call.1} parent=1 // pred_check_branch
      %479 = sbr.rel (0) target = $region49
    $region48: #{tpu_custom_call.1} parent=1 // pred_region
      _
    $region49: #{tpu_custom_call.1} parent=1 // pred_fallthru
      _
    %480 = vsyncpa [#allocation3], 1
    %481 = vsyncpa [#allocation6], 1
    %482 = vsyncpa [#allocation4], 1

</llo_original>
